<compile_context>
chip_gen: v5e
topology: v5e:2x2
jax: 0.10.0
libtpu: 0.0.40
codegen_flags: <defaults>
</compile_context>

<pallas_src>
import functools

import jax
import jax.numpy as jnp
from jax.experimental import pallas as pl
from jax.experimental.pallas import tpu as pltpu

OBS_DIM = 4
NUM_HIDDEN = 128
NUM_ACTIONS = 2

# Packed-parameter column layout: (NUM_HIDDEN, 8) f32
#   cols 0..3 : W1^T              (hidden x obs)
#   col  4    : b1
#   col  5    : w2[:, 0] - w2[:, 1]   (logit-difference weights)
#   col  6    : b2[0] - b2[1]         (replicated scalar)
#   col  7    : zero padding
_PACK_COLS = 8


def _nn_policy_kernel(xt_ref, p_ref, out_ref):
    """One batch tile.

    xt_ref : (OBS_DIM, TB)   input, batch on the lane axis
    p_ref  : (NUM_HIDDEN, 8) packed parameters (see layout above)
    out_ref: (NUM_ACTIONS, TB) probabilities, batch on the lane axis
    """
    xt = xt_ref[...]                                   # (4, TB)
    params = p_ref[...]                                # (128, 8)

    # ---- layer 1: h = relu(W1^T x + b1), built from 4 VPU broadcast-FMAs ----
    h = params[:, 4:5]                                 # b1, (128, 1)
    h = h + params[:, 0:1] * xt[0:1, :]                # (128,1)*(1,TB) -> (128,TB)
    h = h + params[:, 1:2] * xt[1:2, :]
    h = h + params[:, 2:3] * xt[2:3, :]
    h = h + params[:, 3:4] * xt[3:4, :]
    h = jnp.maximum(h, 0.0)                            # ReLU, (128, TB)

    # ---- layer 2 + softmax: 2-class softmax == sigmoid of logit difference ---
    # z = (w2[:,0]-w2[:,1]) . h + (b2[0]-b2[1]);  p0 = sigmoid(z); p1 = 1 - p0
    z = jnp.sum(h * params[:, 5:6], axis=0, keepdims=True) + params[0:1, 6:7]
    p0 = 1.0 / (1.0 + jnp.exp(-z))                     # exp on EUP; exact divide
    out_ref[0:1, :] = p0                               # lane-dense stores
    out_ref[1:2, :] = 1.0 - p0


def _round_up(n, m):
    return ((n + m - 1) // m) * m


def _pack_params(w1, b1, w2, b2):
    """Pack (w1, b1, w2, b2) into a single (NUM_HIDDEN, 8) f32 buffer."""
    packed = jnp.zeros((NUM_HIDDEN, _PACK_COLS), jnp.float32)
    packed = packed.at[:, 0:OBS_DIM].set(w1.T.astype(jnp.float32))      # W1^T
    packed = packed.at[:, 4].set(b1.reshape(-1).astype(jnp.float32))    # b1
    packed = packed.at[:, 5].set(
        (w2[:, 0] - w2[:, 1]).astype(jnp.float32))                      # w2 diff
    b2f = b2.reshape(-1).astype(jnp.float32)
    packed = packed.at[:, 6].set(b2f[0] - b2f[1])                       # b2 diff
    return packed


@functools.partial(jax.jit, static_argnames=())
def nn_policy_forward(x, w1, b1, w2, b2):
    """x: (B, 4) float32 -> (B, 2) float32 action probabilities."""
    x = jnp.asarray(x, jnp.float32)
    B = x.shape[0]

    # Tile the batch on the lane axis: TB is a multiple of 128, capped at 512.
    TB = min(512, _round_up(max(B, 1), 128))
    Bp = _round_up(B, TB)

    packed = _pack_params(w1, b1, w2, b2)

    # Wrapper-side layout plumbing: pad batch and put it on the lane axis.
    xt = jnp.zeros((OBS_DIM, Bp), jnp.float32).at[:, :B].set(x.T)

    out_t = pl.pallas_call(
        _nn_policy_kernel,
        out_shape=jax.ShapeDtypeStruct((NUM_ACTIONS, Bp), jnp.float32),
        grid=(Bp // TB,),
        in_specs=[
            pl.BlockSpec((OBS_DIM, TB), lambda i: (0, i)),       # x^T tile
            pl.BlockSpec((NUM_HIDDEN, _PACK_COLS), lambda i: (0, 0)),  # params
        ],
        out_specs=pl.BlockSpec((NUM_ACTIONS, TB), lambda i: (0, i)),
        compiler_params=pltpu.CompilerParams(
            dimension_semantics=("parallel",)),
    )(xt, packed)                                                # (2, Bp)

    return out_t[:, :B].T                                        # (B, 2)


def init_params(key, num_hidden=NUM_HIDDEN):
    """Deterministic PyTorch-style init: U(-1/sqrt(fan_in), 1/sqrt(fan_in))."""
    k1, k2, k3, k4 = jax.random.split(key, 4)
    bound1 = 1.0 / jnp.sqrt(jnp.float32(OBS_DIM))
    bound2 = 1.0 / jnp.sqrt(jnp.float32(num_hidden))
    w1 = jax.random.uniform(k1, (OBS_DIM, num_hidden), jnp.float32,
                            -bound1, bound1)               # torch l1.weight.T
    b1 = jax.random.uniform(k2, (1, num_hidden), jnp.float32, -bound1, bound1)
    w2 = jax.random.uniform(k3, (num_hidden, NUM_ACTIONS), jnp.float32,
                            -bound2, bound2)               # torch l2.weight.T
    b2 = jax.random.uniform(k4, (1, NUM_ACTIONS), jnp.float32, -bound2, bound2)
    return w1, b1, w2, b2


if __name__ == "__main__":
    key = jax.random.PRNGKey(0)
    k_params, k_x = jax.random.split(key)
    w1, b1, w2, b2 = init_params(k_params)

    batch = 8
    x = jax.random.normal(k_x, (batch, OBS_DIM), dtype=jnp.float32)

    probs = nn_policy_forward(x, w1, b1, w2, b2)
    probs = jax.block_until_ready(probs)

    # sanity: reference in plain JAX (mathematically identical softmax form)
    ref = jax.nn.softmax(jnp.maximum(x @ w1 + b1, 0.0) @ w2 + b2, axis=-1)
    assert probs.shape == (batch, NUM_ACTIONS)
    assert jnp.allclose(probs, ref, atol=1e-5, rtol=1e-5)
    assert jnp.allclose(jnp.sum(probs, axis=-1), 1.0, atol=1e-5)

    # TODO(synk): sample_action's torch.multinomial sampling and get_probs'
    # action gather are left to the host/JAX wrapper (not part of forward()).

    print("KERNEL_OK")
</pallas_src>

<mosaic_0001>
module attributes {stable_mosaic.version = 11 : i64} {
  func.func @_nn_policy_kernel(%arg0: i32, %arg1: memref<4x128xf32, #tpu.memory_space<vmem>>, %arg2: memref<128x8xf32, #tpu.memory_space<vmem>>, %arg3: memref<2x128xf32, #tpu.memory_space<vmem>>) attributes {dimension_semantics = [#tpu.dimension_semantics<parallel>], iteration_bounds = array<i64: 1>, scalar_prefetch = 0 : i64, scratch_operands = 0 : i64, tpu.core_type = #tpu.core_type<tc>, window_params = [{transform_indices = @transform_0, window_bounds = array<i64: 4, 128>}, {pipeline_mode = #tpu.pipeline_mode<synchronous>, transform_indices = @transform_1, window_bounds = array<i64: 128, 8>}, {transform_indices = @transform_2, window_bounds = array<i64: 2, 128>}]} {
    %c0 = arith.constant 0 : index
    %c0_0 = arith.constant 0 : index
    %0 = vector.load %arg1[%c0, %c0_0] : memref<4x128xf32, #tpu.memory_space<vmem>>, vector<4x128xf32>
    %c0_1 = arith.constant 0 : index
    %c0_2 = arith.constant 0 : index
    %1 = vector.load %arg2[%c0_1, %c0_2] : memref<128x8xf32, #tpu.memory_space<vmem>>, vector<128x8xf32>
    %2 = vector.extract_strided_slice %1 {offsets = [0, 4], sizes = [128, 1], strides = [1, 1]} : vector<128x8xf32> to vector<128x1xf32>
    %3 = vector.extract_strided_slice %1 {offsets = [0, 0], sizes = [128, 1], strides = [1, 1]} : vector<128x8xf32> to vector<128x1xf32>
    %4 = vector.extract_strided_slice %0 {offsets = [0, 0], sizes = [1, 128], strides = [1, 1]} : vector<4x128xf32> to vector<1x128xf32>
    %5 = vector.broadcast %3 : vector<128x1xf32> to vector<128x128xf32>
    %6 = vector.broadcast %4 : vector<1x128xf32> to vector<128x128xf32>
    %7 = arith.mulf %5, %6 : vector<128x128xf32>
    %8 = vector.broadcast %2 : vector<128x1xf32> to vector<128x128xf32>
    %9 = arith.addf %8, %7 : vector<128x128xf32>
    %10 = vector.extract_strided_slice %1 {offsets = [0, 1], sizes = [128, 1], strides = [1, 1]} : vector<128x8xf32> to vector<128x1xf32>
    %11 = vector.extract_strided_slice %0 {offsets = [1, 0], sizes = [1, 128], strides = [1, 1]} : vector<4x128xf32> to vector<1x128xf32>
    %12 = vector.broadcast %10 : vector<128x1xf32> to vector<128x128xf32>
    %13 = vector.broadcast %11 : vector<1x128xf32> to vector<128x128xf32>
    %14 = arith.mulf %12, %13 : vector<128x128xf32>
    %15 = arith.addf %9, %14 : vector<128x128xf32>
    %16 = vector.extract_strided_slice %1 {offsets = [0, 2], sizes = [128, 1], strides = [1, 1]} : vector<128x8xf32> to vector<128x1xf32>
    %17 = vector.extract_strided_slice %0 {offsets = [2, 0], sizes = [1, 128], strides = [1, 1]} : vector<4x128xf32> to vector<1x128xf32>
    %18 = vector.broadcast %16 : vector<128x1xf32> to vector<128x128xf32>
    %19 = vector.broadcast %17 : vector<1x128xf32> to vector<128x128xf32>
    %20 = arith.mulf %18, %19 : vector<128x128xf32>
    %21 = arith.addf %15, %20 : vector<128x128xf32>
    %22 = vector.extract_strided_slice %1 {offsets = [0, 3], sizes = [128, 1], strides = [1, 1]} : vector<128x8xf32> to vector<128x1xf32>
    %23 = vector.extract_strided_slice %0 {offsets = [3, 0], sizes = [1, 128], strides = [1, 1]} : vector<4x128xf32> to vector<1x128xf32>
    %24 = vector.broadcast %22 : vector<128x1xf32> to vector<128x128xf32>
    %25 = vector.broadcast %23 : vector<1x128xf32> to vector<128x128xf32>
    %26 = arith.mulf %24, %25 : vector<128x128xf32>
    %27 = arith.addf %21, %26 : vector<128x128xf32>
    %cst = arith.constant 0.000000e+00 : f32
    %28 = vector.broadcast %cst : f32 to vector<128x128xf32>
    %29 = arith.maximumf %27, %28 : vector<128x128xf32>
    %30 = vector.extract_strided_slice %1 {offsets = [0, 5], sizes = [128, 1], strides = [1, 1]} : vector<128x8xf32> to vector<128x1xf32>
    %31 = vector.broadcast %30 : vector<128x1xf32> to vector<128x128xf32>
    %32 = arith.mulf %29, %31 : vector<128x128xf32>
    %cst_3 = arith.constant dense<0.000000e+00> : vector<128xf32>
    %33 = vector.multi_reduction <add>, %32, %cst_3 [0] : vector<128x128xf32> to vector<128xf32>
    %34 = vector.shape_cast %33 : vector<128xf32> to vector<1x128xf32>
    %35 = vector.extract_strided_slice %1 {offsets = [0, 6], sizes = [1, 1], strides = [1, 1]} : vector<128x8xf32> to vector<1x1xf32>
    %36 = vector.broadcast %35 : vector<1x1xf32> to vector<1x128xf32>
    %37 = arith.addf %34, %36 : vector<1x128xf32>
    %cst_4 = arith.constant 0.000000e+00 : f32
    %38 = vector.broadcast %cst_4 : f32 to vector<1x128xf32>
    %39 = arith.subf %38, %37 : vector<1x128xf32>
    %40 = math.exp %39 : vector<1x128xf32>
    %cst_5 = arith.constant 1.000000e+00 : f32
    %41 = vector.broadcast %cst_5 : f32 to vector<1x128xf32>
    %42 = arith.addf %41, %40 : vector<1x128xf32>
    %cst_6 = arith.constant 1.000000e+00 : f32
    %43 = vector.broadcast %cst_6 : f32 to vector<1x128xf32>
    %44 = arith.divf %43, %42 : vector<1x128xf32>
    %c0_7 = arith.constant 0 : index
    %c0_8 = arith.constant 0 : index
    %45 = vector.load %arg3[%c0_7, %c0_8] : memref<2x128xf32, #tpu.memory_space<vmem>>, vector<1x128xf32>
    tpu.vector_store %arg3[%c0_7, %c0_8], %44 {strides = array<i32>} : memref<2x128xf32, #tpu.memory_space<vmem>>, vector<1x128xf32>,
    %cst_9 = arith.constant 1.000000e+00 : f32
    %46 = vector.broadcast %cst_9 : f32 to vector<1x128xf32>
    %47 = arith.subf %46, %44 : vector<1x128xf32>
    %c1 = arith.constant 1 : index
    %c0_10 = arith.constant 0 : index
    %48 = vector.load %arg3[%c1, %c0_10] : memref<2x128xf32, #tpu.memory_space<vmem>>, vector<1x128xf32>
    tpu.vector_store %arg3[%c1, %c0_10], %47 {strides = array<i32>} : memref<2x128xf32, #tpu.memory_space<vmem>>, vector<1x128xf32>,
    return
  }
  func.func @transform_0(%arg0: i32) -> (i32, i32) {
    %c0_i32 = arith.constant 0 : i32
    %c0_i32_0 = arith.constant 0 : i32
    return %c0_i32, %arg0 : i32, i32
  }
  func.func @transform_1(%arg0: i32) -> (i32, i32) {
    %c0_i32 = arith.constant 0 : i32
    %c0_i32_0 = arith.constant 0 : i32
    %c0_i32_1 = arith.constant 0 : i32
    return %c0_i32, %c0_i32_0 : i32, i32
  }
  func.func @transform_2(%arg0: i32) -> (i32, i32) {
    %c0_i32 = arith.constant 0 : i32
    %c0_i32_0 = arith.constant 0 : i32
    return %c0_i32, %arg0 : i32, i32
  }
}

</mosaic_0001>

<llo_original>
// kernel: nn_policy_forward.1
$region0: #{nn_policy_forward.1}
  #allocation0 [shape = 'u32[]', space=smem, size = 0x4, offset = 0x4, fixed_abs, tag = 'smem constant byte address 0x4 - core index']
  #allocation1 [shape = 'u32[72,128]{1,0:T(1,128)}', space=vmem, size = 0x9000, scoped, tag = 'internal scratch']
  %s0 = inlined_call_operand.vmem [shape: f32[4,128], index: 0, kind: input, shape index: {}]
  %s1 = inlined_call_operand.vmem [shape: f32[128,8], index: 1, kind: input, shape index: {}]
  %s2 = inlined_call_operand.vmem [shape: f32[2,128], index: 2, kind: output, shape index: {}]
  %s3 = sld [smem:[#allocation0]]
  $region18: #{nn_policy_forward.1} parent=0
    _
  %s5 = ssub.s32 1, %s3
  %s6 = scalar_select 0, %s5, %s3
  // Predicated region
  $region2: #{nn_policy_forward.1} parent=0 // pred_check
    _
  $region3: #{nn_policy_forward.1} parent=0 // pred_check_branch
    %8 = sbr.rel (0) target = $region5
  $region4: #{nn_policy_forward.1} parent=0 // pred_region
    _
  $region5: #{nn_policy_forward.1} parent=0 // pred_fallthru
    _
  // Predicated region
  $region6: #{nn_policy_forward.1} parent=0 // pred_check
    _
  $region7: #{nn_policy_forward.1} parent=0 // pred_check_branch
    %10 = sbr.rel (0) target = $region9
  $region8: #{nn_policy_forward.1} parent=0 // pred_region
    _
  $region9: #{nn_policy_forward.1} parent=0 // pred_fallthru
    _
  %v11 = vld [vmem:[%s0] sm:$0xf]
  %v12 = vld [vmem:[%s1] sm:$0xff]
  %v13 = vld [vmem:[%s1 + $0x8] sm:$0xff]
  %v14 = vld [vmem:[%s1 + $0x10] sm:$0xff]
  %v15 = vld [vmem:[%s1 + $0x18] sm:$0xff]
  %v16 = vld [vmem:[%s1 + $0x20] sm:$0xff]
  %v17 = vld [vmem:[%s1 + $0x28] sm:$0xff]
  %v18 = vld [vmem:[%s1 + $0x30] sm:$0xff]
  %v19 = vld [vmem:[%s1 + $0x38] sm:$0xff]
  %v20 = vld [vmem:[%s1 + $0x40] sm:$0xff]
  %v21 = vld [vmem:[%s1 + $0x48] sm:$0xff]
  %v22 = vld [vmem:[%s1 + $0x50] sm:$0xff]
  %v23 = vld [vmem:[%s1 + $0x58] sm:$0xff]
  %v24 = vld [vmem:[%s1 + $0x60] sm:$0xff]
  %v25 = vld [vmem:[%s1 + $0x68] sm:$0xff]
  %v26 = vld [vmem:[%s1 + $0x70] sm:$0xff]
  %v27 = vld [vmem:[%s1 + $0x78] sm:$0xff]
  %29 = vset.pattern.permute.xlu0 0
  %30 = vperm.xlu0 %29, %v12
  %v31 = vpop.permute.xlu0 %30
  %34 = vset.pattern.permute.xlu0 0
  %35 = vperm.xlu0 %34, %v13
  %v36 = vpop.permute.xlu0 %35
  %39 = vset.pattern.permute.xlu0 0
  %40 = vperm.xlu0 %39, %v14
  %v41 = vpop.permute.xlu0 %40
  %44 = vset.pattern.permute.xlu0 0
  %45 = vperm.xlu0 %44, %v15
  %v46 = vpop.permute.xlu0 %45
  %49 = vset.pattern.permute.xlu0 0
  %50 = vperm.xlu0 %49, %v16
  %v51 = vpop.permute.xlu0 %50
  %54 = vset.pattern.permute.xlu0 0
  %55 = vperm.xlu0 %54, %v17
  %v56 = vpop.permute.xlu0 %55
  %59 = vset.pattern.permute.xlu0 0
  %60 = vperm.xlu0 %59, %v18
  %v61 = vpop.permute.xlu0 %60
  %64 = vset.pattern.permute.xlu0 0
  %65 = vperm.xlu0 %64, %v19
  %v66 = vpop.permute.xlu0 %65
  %69 = vset.pattern.permute.xlu0 0
  %70 = vperm.xlu0 %69, %v20
  %v71 = vpop.permute.xlu0 %70
  %74 = vset.pattern.permute.xlu0 0
  %75 = vperm.xlu0 %74, %v21
  %v76 = vpop.permute.xlu0 %75
  %79 = vset.pattern.permute.xlu0 0
  %80 = vperm.xlu0 %79, %v22
  %v81 = vpop.permute.xlu0 %80
  %84 = vset.pattern.permute.xlu0 0
  %85 = vperm.xlu0 %84, %v23
  %v86 = vpop.permute.xlu0 %85
  %89 = vset.pattern.permute.xlu0 0
  %90 = vperm.xlu0 %89, %v24
  %v91 = vpop.permute.xlu0 %90
  %94 = vset.pattern.permute.xlu0 0
  %95 = vperm.xlu0 %94, %v25
  %v96 = vpop.permute.xlu0 %95
  %99 = vset.pattern.permute.xlu0 0
  %100 = vperm.xlu0 %99, %v26
  %v101 = vpop.permute.xlu0 %100
  %104 = vset.pattern.permute.xlu0 0
  %105 = vperm.xlu0 %104, %v27
  %v106 = vpop.permute.xlu0 %105
  %v108 = vperm.slane %v11, 0
  %v109 = vmul.f32 %v31, %v108
  %v110 = vmul.f32 %v36, %v108
  %v111 = vmul.f32 %v41, %v108
  %v112 = vmul.f32 %v46, %v108
  %v113 = vmul.f32 %v51, %v108
  %v114 = vmul.f32 %v56, %v108
  %v115 = vmul.f32 %v61, %v108
  %v116 = vmul.f32 %v66, %v108
  %v117 = vmul.f32 %v71, %v108
  %v118 = vmul.f32 %v76, %v108
  %v119 = vmul.f32 %v81, %v108
  %v120 = vmul.f32 %v86, %v108
  %v121 = vmul.f32 %v91, %v108
  %v122 = vmul.f32 %v96, %v108
  %v123 = vmul.f32 %v101, %v108
  %v124 = vmul.f32 %v106, %v108
  %125 = vset.pattern.permute.xlu0 4
  %126 = vperm.xlu0 %125, %v12
  %v127 = vpop.permute.xlu0 %126
  %129 = vset.pattern.permute.xlu0 4
  %130 = vperm.xlu0 %129, %v13
  %v131 = vpop.permute.xlu0 %130
  %133 = vset.pattern.permute.xlu0 4
  %134 = vperm.xlu0 %133, %v14
  %v135 = vpop.permute.xlu0 %134
  %137 = vset.pattern.permute.xlu0 4
  %138 = vperm.xlu0 %137, %v15
  %v139 = vpop.permute.xlu0 %138
  %141 = vset.pattern.permute.xlu0 4
  %142 = vperm.xlu0 %141, %v16
  %v143 = vpop.permute.xlu0 %142
  %145 = vset.pattern.permute.xlu0 4
  %146 = vperm.xlu0 %145, %v17
  %v147 = vpop.permute.xlu0 %146
  %149 = vset.pattern.permute.xlu0 4
  %150 = vperm.xlu0 %149, %v18
  %v151 = vpop.permute.xlu0 %150
  %153 = vset.pattern.permute.xlu0 4
  %154 = vperm.xlu0 %153, %v19
  %v155 = vpop.permute.xlu0 %154
  %157 = vset.pattern.permute.xlu0 4
  %158 = vperm.xlu0 %157, %v20
  %v159 = vpop.permute.xlu0 %158
  %161 = vset.pattern.permute.xlu0 4
  %162 = vperm.xlu0 %161, %v21
  %v163 = vpop.permute.xlu0 %162
  %165 = vset.pattern.permute.xlu0 4
  %166 = vperm.xlu0 %165, %v22
  %v167 = vpop.permute.xlu0 %166
  %169 = vset.pattern.permute.xlu0 4
  %170 = vperm.xlu0 %169, %v23
  %v171 = vpop.permute.xlu0 %170
  %173 = vset.pattern.permute.xlu0 4
  %174 = vperm.xlu0 %173, %v24
  %v175 = vpop.permute.xlu0 %174
  %177 = vset.pattern.permute.xlu0 4
  %178 = vperm.xlu0 %177, %v25
  %v179 = vpop.permute.xlu0 %178
  %181 = vset.pattern.permute.xlu0 4
  %182 = vperm.xlu0 %181, %v26
  %v183 = vpop.permute.xlu0 %182
  %185 = vset.pattern.permute.xlu0 4
  %186 = vperm.xlu0 %185, %v27
  %v187 = vpop.permute.xlu0 %186
  %v189 = vadd.f32 %v127, %v109
  %v190 = vadd.f32 %v131, %v110
  %v191 = vadd.f32 %v135, %v111
  %v192 = vadd.f32 %v139, %v112
  %v193 = vadd.f32 %v143, %v113
  %v194 = vadd.f32 %v147, %v114
  %v195 = vadd.f32 %v151, %v115
  %v196 = vadd.f32 %v155, %v116
  %v197 = vadd.f32 %v159, %v117
  %v198 = vadd.f32 %v163, %v118
  %v199 = vadd.f32 %v167, %v119
  %v200 = vadd.f32 %v171, %v120
  %v201 = vadd.f32 %v175, %v121
  %v202 = vadd.f32 %v179, %v122
  %v203 = vadd.f32 %v183, %v123
  %v204 = vadd.f32 %v187, %v124
  %205 = vset.pattern.permute.xlu0 1
  %206 = vperm.xlu0 %205, %v12
  %v207 = vpop.permute.xlu0 %206
  %209 = vset.pattern.permute.xlu0 1
  %210 = vperm.xlu0 %209, %v13
  %v211 = vpop.permute.xlu0 %210
  %213 = vset.pattern.permute.xlu0 1
  %214 = vperm.xlu0 %213, %v14
  %v215 = vpop.permute.xlu0 %214
  %217 = vset.pattern.permute.xlu0 1
  %218 = vperm.xlu0 %217, %v15
  %v219 = vpop.permute.xlu0 %218
  %221 = vset.pattern.permute.xlu0 1
  %222 = vperm.xlu0 %221, %v16
  %v223 = vpop.permute.xlu0 %222
  %225 = vset.pattern.permute.xlu0 1
  %226 = vperm.xlu0 %225, %v17
  %v227 = vpop.permute.xlu0 %226
  %229 = vset.pattern.permute.xlu0 1
  %230 = vperm.xlu0 %229, %v18
  %v231 = vpop.permute.xlu0 %230
  %233 = vset.pattern.permute.xlu0 1
  %234 = vperm.xlu0 %233, %v19
  %v235 = vpop.permute.xlu0 %234
  %237 = vset.pattern.permute.xlu0 1
  %238 = vperm.xlu0 %237, %v20
  %v239 = vpop.permute.xlu0 %238
  %241 = vset.pattern.permute.xlu0 1
  %242 = vperm.xlu0 %241, %v21
  %v243 = vpop.permute.xlu0 %242
  %245 = vset.pattern.permute.xlu0 1
  %246 = vperm.xlu0 %245, %v22
  %v247 = vpop.permute.xlu0 %246
  %249 = vset.pattern.permute.xlu0 1
  %250 = vperm.xlu0 %249, %v23
  %v251 = vpop.permute.xlu0 %250
  %253 = vset.pattern.permute.xlu0 1
  %254 = vperm.xlu0 %253, %v24
  %v255 = vpop.permute.xlu0 %254
  %257 = vset.pattern.permute.xlu0 1
  %258 = vperm.xlu0 %257, %v25
  %v259 = vpop.permute.xlu0 %258
  %261 = vset.pattern.permute.xlu0 1
  %262 = vperm.xlu0 %261, %v26
  %v263 = vpop.permute.xlu0 %262
  %265 = vset.pattern.permute.xlu0 1
  %266 = vperm.xlu0 %265, %v27
  %v267 = vpop.permute.xlu0 %266
  %v269 = vperm.slane %v11, 1
  %v270 = vmul.f32 %v207, %v269
  %v271 = vmul.f32 %v211, %v269
  %v272 = vmul.f32 %v215, %v269
  %v273 = vmul.f32 %v219, %v269
  %v274 = vmul.f32 %v223, %v269
  %v275 = vmul.f32 %v227, %v269
  %v276 = vmul.f32 %v231, %v269
  %v277 = vmul.f32 %v235, %v269
  %v278 = vmul.f32 %v239, %v269
  %v279 = vmul.f32 %v243, %v269
  %v280 = vmul.f32 %v247, %v269
  %v281 = vmul.f32 %v251, %v269
  %v282 = vmul.f32 %v255, %v269
  %v283 = vmul.f32 %v259, %v269
  %v284 = vmul.f32 %v263, %v269
  %v285 = vmul.f32 %v267, %v269
  %v286 = vadd.f32 %v189, %v270
  %v287 = vadd.f32 %v190, %v271
  %v288 = vadd.f32 %v191, %v272
  %v289 = vadd.f32 %v192, %v273
  %v290 = vadd.f32 %v193, %v274
  %v291 = vadd.f32 %v194, %v275
  %v292 = vadd.f32 %v195, %v276
  %v293 = vadd.f32 %v196, %v277
  %v294 = vadd.f32 %v197, %v278
  %v295 = vadd.f32 %v198, %v279
  %v296 = vadd.f32 %v199, %v280
  %v297 = vadd.f32 %v200, %v281
  %v298 = vadd.f32 %v201, %v282
  %v299 = vadd.f32 %v202, %v283
  %v300 = vadd.f32 %v203, %v284
  %v301 = vadd.f32 %v204, %v285
  %302 = vset.pattern.permute.xlu0 2
  %303 = vperm.xlu0 %302, %v12
  %v304 = vpop.permute.xlu0 %303
  %306 = vset.pattern.permute.xlu0 2
  %307 = vperm.xlu0 %306, %v13
  %v308 = vpop.permute.xlu0 %307
  %310 = vset.pattern.permute.xlu0 2
  %311 = vperm.xlu0 %310, %v14
  %v312 = vpop.permute.xlu0 %311
  %314 = vset.pattern.permute.xlu0 2
  %315 = vperm.xlu0 %314, %v15
  %v316 = vpop.permute.xlu0 %315
  %318 = vset.pattern.permute.xlu0 2
  %319 = vperm.xlu0 %318, %v16
  %v320 = vpop.permute.xlu0 %319
  %322 = vset.pattern.permute.xlu0 2
  %323 = vperm.xlu0 %322, %v17
  %v324 = vpop.permute.xlu0 %323
  %326 = vset.pattern.permute.xlu0 2
  %327 = vperm.xlu0 %326, %v18
  %v328 = vpop.permute.xlu0 %327
  %330 = vset.pattern.permute.xlu0 2
  %331 = vperm.xlu0 %330, %v19
  %v332 = vpop.permute.xlu0 %331
  %334 = vset.pattern.permute.xlu0 2
  %335 = vperm.xlu0 %334, %v20
  %v336 = vpop.permute.xlu0 %335
  %338 = vset.pattern.permute.xlu0 2
  %339 = vperm.xlu0 %338, %v21
  %v340 = vpop.permute.xlu0 %339
  %342 = vset.pattern.permute.xlu0 2
  %343 = vperm.xlu0 %342, %v22
  %v344 = vpop.permute.xlu0 %343
  %346 = vset.pattern.permute.xlu0 2
  %347 = vperm.xlu0 %346, %v23
  %v348 = vpop.permute.xlu0 %347
  %350 = vset.pattern.permute.xlu0 2
  %351 = vperm.xlu0 %350, %v24
  %v352 = vpop.permute.xlu0 %351
  %354 = vset.pattern.permute.xlu0 2
  %355 = vperm.xlu0 %354, %v25
  %v356 = vpop.permute.xlu0 %355
  %358 = vset.pattern.permute.xlu0 2
  %359 = vperm.xlu0 %358, %v26
  %v360 = vpop.permute.xlu0 %359
  %362 = vset.pattern.permute.xlu0 2
  %363 = vperm.xlu0 %362, %v27
  %v364 = vpop.permute.xlu0 %363
  %v366 = vperm.slane %v11, 2
  %v367 = vmul.f32 %v304, %v366
  %v368 = vmul.f32 %v308, %v366
  %v369 = vmul.f32 %v312, %v366
  %v370 = vmul.f32 %v316, %v366
  %v371 = vmul.f32 %v320, %v366
  %v372 = vmul.f32 %v324, %v366
  %v373 = vmul.f32 %v328, %v366
  %v374 = vmul.f32 %v332, %v366
  %v375 = vmul.f32 %v336, %v366
  %v376 = vmul.f32 %v340, %v366
  %v377 = vmul.f32 %v344, %v366
  %v378 = vmul.f32 %v348, %v366
  %v379 = vmul.f32 %v352, %v366
  %v380 = vmul.f32 %v356, %v366
  %v381 = vmul.f32 %v360, %v366
  %v382 = vmul.f32 %v364, %v366
  %v383 = vadd.f32 %v286, %v367
  %v384 = vadd.f32 %v287, %v368
  %v385 = vadd.f32 %v288, %v369
  %v386 = vadd.f32 %v289, %v370
  %v387 = vadd.f32 %v290, %v371
  %v388 = vadd.f32 %v291, %v372
  %v389 = vadd.f32 %v292, %v373
  %v390 = vadd.f32 %v293, %v374
  %v391 = vadd.f32 %v294, %v375
  %v392 = vadd.f32 %v295, %v376
  %v393 = vadd.f32 %v296, %v377
  %v394 = vadd.f32 %v297, %v378
  %v395 = vadd.f32 %v298, %v379
  %v396 = vadd.f32 %v299, %v380
  %v397 = vadd.f32 %v300, %v381
  %v398 = vadd.f32 %v301, %v382
  %399 = vset.pattern.permute.xlu0 3
  %400 = vperm.xlu0 %399, %v12
  %v401 = vpop.permute.xlu0 %400
  %403 = vset.pattern.permute.xlu0 3
  %404 = vperm.xlu0 %403, %v13
  %v405 = vpop.permute.xlu0 %404
  %407 = vset.pattern.permute.xlu0 3
  %408 = vperm.xlu0 %407, %v14
  %v409 = vpop.permute.xlu0 %408
  %411 = vset.pattern.permute.xlu0 3
  %412 = vperm.xlu0 %411, %v15
  %v413 = vpop.permute.xlu0 %412
  %415 = vset.pattern.permute.xlu0 3
  %416 = vperm.xlu0 %415, %v16
  %v417 = vpop.permute.xlu0 %416
  %419 = vset.pattern.permute.xlu0 3
  %420 = vperm.xlu0 %419, %v17
  %v421 = vpop.permute.xlu0 %420
  %423 = vset.pattern.permute.xlu0 3
  %424 = vperm.xlu0 %423, %v18
  %v425 = vpop.permute.xlu0 %424
  %427 = vset.pattern.permute.xlu0 3
  %428 = vperm.xlu0 %427, %v19
  %v429 = vpop.permute.xlu0 %428
  %431 = vset.pattern.permute.xlu0 3
  %432 = vperm.xlu0 %431, %v20
  %v433 = vpop.permute.xlu0 %432
  %435 = vset.pattern.permute.xlu0 3
  %436 = vperm.xlu0 %435, %v21
  %v437 = vpop.permute.xlu0 %436
  %439 = vset.pattern.permute.xlu0 3
  %440 = vperm.xlu0 %439, %v22
  %v441 = vpop.permute.xlu0 %440
  %443 = vset.pattern.permute.xlu0 3
  %444 = vperm.xlu0 %443, %v23
  %v445 = vpop.permute.xlu0 %444
  %447 = vset.pattern.permute.xlu0 3
  %448 = vperm.xlu0 %447, %v24
  %v449 = vpop.permute.xlu0 %448
  %451 = vset.pattern.permute.xlu0 3
  %452 = vperm.xlu0 %451, %v25
  %v453 = vpop.permute.xlu0 %452
  %455 = vset.pattern.permute.xlu0 3
  %456 = vperm.xlu0 %455, %v26
  %v457 = vpop.permute.xlu0 %456
  %459 = vset.pattern.permute.xlu0 3
  %460 = vperm.xlu0 %459, %v27
  %v461 = vpop.permute.xlu0 %460
  %v463 = vperm.slane %v11, 3
  %v464 = vmul.f32 %v401, %v463
  %v465 = vmul.f32 %v405, %v463
  %v466 = vmul.f32 %v409, %v463
  %v467 = vmul.f32 %v413, %v463
  %v468 = vmul.f32 %v417, %v463
  %v469 = vmul.f32 %v421, %v463
  %v470 = vmul.f32 %v425, %v463
  %v471 = vmul.f32 %v429, %v463
  %v472 = vmul.f32 %v433, %v463
  %v473 = vmul.f32 %v437, %v463
  %v474 = vmul.f32 %v441, %v463
  %v475 = vmul.f32 %v445, %v463
  %v476 = vmul.f32 %v449, %v463
  %v477 = vmul.f32 %v453, %v463
  %v478 = vmul.f32 %v457, %v463
  %v479 = vmul.f32 %v461, %v463
  %v480 = vadd.f32 %v383, %v464
  %v481 = vadd.f32 %v384, %v465
  %v482 = vadd.f32 %v385, %v466
  %v483 = vadd.f32 %v386, %v467
  %v484 = vadd.f32 %v387, %v468
  %v485 = vadd.f32 %v388, %v469
  %v486 = vadd.f32 %v389, %v470
  %v487 = vadd.f32 %v390, %v471
  %v488 = vadd.f32 %v391, %v472
  %v489 = vadd.f32 %v392, %v473
  %v490 = vadd.f32 %v393, %v474
  %v491 = vadd.f32 %v394, %v475
  %v492 = vadd.f32 %v395, %v476
  %v493 = vadd.f32 %v396, %v477
  %v494 = vadd.f32 %v397, %v478
  %v495 = vadd.f32 %v398, %v479
  %v496 = vmax.f32 %v480, 0.0
  %v497 = vmax.f32 %v481, 0.0
  %v498 = vmax.f32 %v482, 0.0
  %v499 = vmax.f32 %v483, 0.0
  %v500 = vmax.f32 %v484, 0.0
  %v501 = vmax.f32 %v485, 0.0
  %v502 = vmax.f32 %v486, 0.0
  %v503 = vmax.f32 %v487, 0.0
  %v504 = vmax.f32 %v488, 0.0
  %v505 = vmax.f32 %v489, 0.0
  %v506 = vmax.f32 %v490, 0.0
  %v507 = vmax.f32 %v491, 0.0
  %v508 = vmax.f32 %v492, 0.0
  %v509 = vmax.f32 %v493, 0.0
  %v510 = vmax.f32 %v494, 0.0
  %v511 = vmax.f32 %v495, 0.0
  %512 = vset.pattern.permute.xlu0 5
  %513 = vperm.xlu0 %512, %v12
  %v514 = vpop.permute.xlu0 %513
  %516 = vset.pattern.permute.xlu0 5
  %517 = vperm.xlu0 %516, %v13
  %v518 = vpop.permute.xlu0 %517
  %520 = vset.pattern.permute.xlu0 5
  %521 = vperm.xlu0 %520, %v14
  %v522 = vpop.permute.xlu0 %521
  %524 = vset.pattern.permute.xlu0 5
  %525 = vperm.xlu0 %524, %v15
  %v526 = vpop.permute.xlu0 %525
  %528 = vset.pattern.permute.xlu0 5
  %529 = vperm.xlu0 %528, %v16
  %v530 = vpop.permute.xlu0 %529
  %532 = vset.pattern.permute.xlu0 5
  %533 = vperm.xlu0 %532, %v17
  %v534 = vpop.permute.xlu0 %533
  %536 = vset.pattern.permute.xlu0 5
  %537 = vperm.xlu0 %536, %v18
  %v538 = vpop.permute.xlu0 %537
  %540 = vset.pattern.permute.xlu0 5
  %541 = vperm.xlu0 %540, %v19
  %v542 = vpop.permute.xlu0 %541
  %544 = vset.pattern.permute.xlu0 5
  %545 = vperm.xlu0 %544, %v20
  %v546 = vpop.permute.xlu0 %545
  %548 = vset.pattern.permute.xlu0 5
  %549 = vperm.xlu0 %548, %v21
  %v550 = vpop.permute.xlu0 %549
  %552 = vset.pattern.permute.xlu0 5
  %553 = vperm.xlu0 %552, %v22
  %v554 = vpop.permute.xlu0 %553
  %556 = vset.pattern.permute.xlu0 5
  %557 = vperm.xlu0 %556, %v23
  %v558 = vpop.permute.xlu0 %557
  %560 = vset.pattern.permute.xlu0 5
  %561 = vperm.xlu0 %560, %v24
  %v562 = vpop.permute.xlu0 %561
  %564 = vset.pattern.permute.xlu0 5
  %565 = vperm.xlu0 %564, %v25
  %v566 = vpop.permute.xlu0 %565
  %568 = vset.pattern.permute.xlu0 5
  %569 = vperm.xlu0 %568, %v26
  %v570 = vpop.permute.xlu0 %569
  %572 = vset.pattern.permute.xlu0 5
  %573 = vperm.xlu0 %572, %v27
  %v574 = vpop.permute.xlu0 %573
  %v576 = vmul.f32 %v496, %v514
  %v577 = vmul.f32 %v497, %v518
  %v578 = vmul.f32 %v498, %v522
  %v579 = vmul.f32 %v499, %v526
  %v580 = vmul.f32 %v500, %v530
  %v581 = vmul.f32 %v501, %v534
  %v582 = vmul.f32 %v502, %v538
  %v583 = vmul.f32 %v503, %v542
  %v584 = vmul.f32 %v504, %v546
  %v585 = vmul.f32 %v505, %v550
  %v586 = vmul.f32 %v506, %v554
  %v587 = vmul.f32 %v507, %v558
  %v588 = vmul.f32 %v508, %v562
  %v589 = vmul.f32 %v509, %v566
  %v590 = vmul.f32 %v510, %v570
  %v591 = vmul.f32 %v511, %v574
  %v592 = vadd.f32 %v576, %v577
  %v593 = vadd.f32 %v592, %v578
  %v594 = vadd.f32 %v593, %v579
  %v595 = vadd.f32 %v594, %v580
  %v596 = vadd.f32 %v595, %v581
  %v597 = vadd.f32 %v596, %v582
  %v598 = vadd.f32 %v597, %v583
  %v599 = vadd.f32 %v598, %v584
  %v600 = vadd.f32 %v599, %v585
  %v601 = vadd.f32 %v600, %v586
  %v602 = vadd.f32 %v601, %v587
  %v603 = vadd.f32 %v602, %v588
  %v604 = vadd.f32 %v603, %v589
  %v605 = vadd.f32 %v604, %v590
  %v606 = vadd.f32 %v605, %v591
  %v607 = vrot.slane %v606, 4
  %v608 = vadd.f32 %v606, %v607
  %v609 = vrot.slane %v608, 2
  %v610 = vadd.f32 %v608, %v609
  %v611 = vrot.slane %v610, 1
  %v612 = vadd.f32 %v610, %v611
  %613 = vset.pattern.permute.xlu0 6
  %614 = vperm.xlu0 %613, %v12
  %v615 = vpop.permute.xlu0 %614
  %v617 = vadd.f32 %v612, %v615
  %v618 = vsub.f32 0.0, %v617
  %v619 = vmul.f32 %v618, 1.442695
  %v620 = vpow.pop %v619
  %v621 = vadd.f32 %v620, 1.0
  %v622 = vrcp.pop %v621
  %v623 = vmul.f32 %v621, %v622
  %v624 = vsub.f32 1.0, %v623
  %v625 = vmul.f32 %v622, %v624
  %v626 = vadd.f32 %v622, %v625
  %vm627 = vweird.f32 %v621
  %vm628 = vweird.f32 %v622
  %vm629 = vmor %vm627, %vm628
  %v630 = vsel %vm629, %v622, %v626
  %v631 = vand.u32 2147483647, %v621
  %vm632 = vcmp.eq.f32.partialorder %v631, 8.507059e+37
  %v633 = vand.u32 %v621, 2147483648
  %v634 = vor.u32 1.1754944e-38, %v633
  %v635 = vsel %vm632, %v634, %v630
  %v636 = vmul.f32 1.0, %v635
  %637 = vst [vmem:[%s2] sm:$0x1] %v636
  %v638 = vsub.f32 1.0, %v636
  %639 = vst [vmem:[%s2 + $0x1] sm:$0x1] %v638
  // Predicated region
  $region10: #{nn_policy_forward.1} parent=0 // pred_check
    _
  $region11: #{nn_policy_forward.1} parent=0 // pred_check_branch
    %641 = sbr.rel (0) target = $region13
  $region12: #{nn_policy_forward.1} parent=0 // pred_region
    _
  $region13: #{nn_policy_forward.1} parent=0 // pred_fallthru
    _
  // Predicated region
  $region14: #{nn_policy_forward.1} parent=0 // pred_check
    _
  $region15: #{nn_policy_forward.1} parent=0 // pred_check_branch
    %643 = sbr.rel (0) target = $region17
  $region16: #{nn_policy_forward.1} parent=0 // pred_region
    _
  $region17: #{nn_policy_forward.1} parent=0 // pred_fallthru
    _

</llo_original>
